<compile_context>
chip_gen: v7x
topology: tpu7x:2x2x1
jax: 0.10.0
libtpu: 0.0.40
codegen_flags: <defaults>
</compile_context>

<pallas_src>
import jax
import jax.numpy as jnp
from jax import lax
from jax.experimental import pallas as pl
from jax.experimental.pallas import tpu as pltpu

_LANE = 128
_TM_MAX = 2048                   # rows per block -> (2048,128) f32 = 1 MiB
_VMEM_LIMIT = 32 * 1024 * 1024   # 3 in x 2 buf x 1 MiB + 1 MiB acc ~= 7 MiB used


def _num_tensorcores():
    """TensorCores per chip: 2 on v7x-class parts, 1 on v5e/v6e."""
    try:
        kind = jax.devices()[0].device_kind.lower()
    except Exception:
        return 1
    return 2 if "v7" in kind else 1


def _make_sum_kernel(weighted, scale, tm, valid_rows, ragged):
    """Pure-VPU accumulate into a VMEM scratch; finalize folds to (8,128)."""
    scale = float(scale)

    def kernel(*refs):
        if weighted:
            pred_ref, tgt_ref, w_ref, out_ref, acc_ref = refs
        else:
            pred_ref, tgt_ref, out_ref, acc_ref = refs
            w_ref = None

        c = pl.program_id(0)
        j = pl.program_id(1)
        inner = pl.num_programs(1)

        @pl.when(j == 0)
        def _init():
            acc_ref[...] = jnp.zeros_like(acc_ref)

        d = jnp.abs(pred_ref[...].astype(jnp.float32)
                    - tgt_ref[...].astype(jnp.float32))
        if weighted:
            d = d * w_ref[...].astype(jnp.float32)
        if ragged:
            # Last block extends past the slab: zero the contribution of
            # out-of-bounds rows (their VMEM contents are undefined).
            base = (c * inner + j) * tm
            row_ids = base + lax.broadcasted_iota(jnp.int32, (tm, _LANE), 0)
            d = jnp.where(row_ids < valid_rows, d, 0.0)
        acc_ref[...] += d          # pure VPU accumulation, no per-step reduce

        @pl.when(j == inner - 1)
        def _finalize():
            acc = acc_ref[...]
            if scale != 1.0:       # fuse loss_weight (and 1/N for 'mean')
                acc = acc * scale
            # One-time fold to a tiny (8,128) block (KiB writeback, not MiB).
            if tm % 8 == 0:
                red = acc.reshape(tm // 8, 8, _LANE).sum(axis=0)
            else:
                s = jnp.sum(acc, axis=0, keepdims=True)          # (1, 128)
                row0 = lax.broadcasted_iota(jnp.int32, (8, _LANE), 0) == 0
                red = jnp.where(row0, jnp.broadcast_to(s, (8, _LANE)), 0.0)
            out_ref[...] = red

    return kernel


def _make_none_kernel(weighted, scale):
    """Elementwise loss_weight * |pred - target| (* weight)."""
    scale = float(scale)

    def kernel(*refs):
        if weighted:
            pred_ref, tgt_ref, w_ref, out_ref = refs
        else:
            pred_ref, tgt_ref, out_ref = refs
            w_ref = None

        d = jnp.abs(pred_ref[...].astype(jnp.float32)
                    - tgt_ref[...].astype(jnp.float32))
        if weighted:
            d = d * w_ref[...].astype(jnp.float32)
        if scale != 1.0:
            d = d * scale
        out_ref[...] = d.astype(out_ref.dtype)

    return kernel


def l1_loss_pallas(pred, target, weight=None, reduction='mean',
                   loss_weight=1.0):
    assert pred.shape == target.shape
    if reduction not in ('mean', 'sum', 'none'):
        raise ValueError(f"unsupported reduction: {reduction}")
    orig_shape = pred.shape
    orig_dtype = pred.dtype
    n = int(pred.size)
    weighted = weight is not None
    if weighted:
        assert weight.shape == pred.shape
    loss_weight = float(loss_weight)

    if n == 0:
        if reduction == 'none':
            return jnp.zeros(orig_shape, orig_dtype)
        return jnp.zeros((), orig_dtype)

    rows = -(-n // _LANE)                        # ceil(n / 128)
    aligned = (rows * _LANE == n)

    def to_slab(x):
        flat = x.reshape(-1)
        if aligned:
            return flat.reshape(rows, _LANE)     # free reshape, no HBM copy
        # TODO(synk): non-128-divisible sizes still pay one minimal pad copy;
        # avoiding it would need a manual-DMA tail path.
        flat = jnp.pad(flat, (0, rows * _LANE - n))
        return flat.reshape(rows, _LANE)

    args = [pred, target] + ([weight] if weighted else [])
    slabs = [to_slab(a) for a in args]
    in_bytes = sum(int(s.size) * s.dtype.itemsize for s in slabs)
    flops = (4 if weighted else 3) * n

    # tm = full row count (single block, exempt from the (8,128) rule) or
    # 2048 (multiple of every sublane packing) for large inputs.
    if rows <= _TM_MAX:
        tm = rows
    else:
        tm = _TM_MAX
    nblocks = -(-rows // tm)
    ragged = (rows % tm != 0)

    if reduction == 'none':
        out_bytes = rows * _LANE * jnp.dtype(orig_dtype).itemsize
        out = pl.pallas_call(
            _make_none_kernel(weighted, loss_weight),
            out_shape=jax.ShapeDtypeStruct((rows, _LANE), orig_dtype),
            grid=(nblocks,),
            in_specs=[pl.BlockSpec((tm, _LANE), lambda i: (i, 0))] * len(slabs),
            out_specs=pl.BlockSpec((tm, _LANE), lambda i: (i, 0)),
            compiler_params=pltpu.CompilerParams(
                dimension_semantics=("parallel",),
                vmem_limit_bytes=_VMEM_LIMIT),
            cost_estimate=pl.CostEstimate(
                flops=flops, transcendentals=0,
                bytes_accessed=in_bytes + out_bytes),
        )(*slabs)
        if aligned:
            return out.reshape(orig_shape)       # free reshape back
        return out.reshape(-1)[:n].reshape(orig_shape)

    # 'mean' divides by total element count (mmdet avg_factor=None semantics).
    scale = loss_weight / float(n) if reduction == 'mean' else loss_weight

    # 2-way split only on 2-TensorCore chips (v7x) with an even block count so
    # every block's base row stays in bounds; otherwise a single accumulator.
    npart = _num_tensorcores()
    if npart < 2 or nblocks < 2 or nblocks % npart != 0:
        npart = 1
    inner = nblocks // npart

    # TODO(synk): on v7x, verify via xprof that the "parallel" leading axis is
    # core-split; if not, switch it to pltpu.CORE_PARALLEL.
    partials = pl.pallas_call(
        _make_sum_kernel(weighted, scale, tm, rows, ragged),
        out_shape=jax.ShapeDtypeStruct((npart * 8, _LANE), jnp.float32),
        grid=(npart, inner),
        in_specs=[pl.BlockSpec((tm, _LANE),
                               lambda c, j: (c * inner + j, 0))] * len(slabs),
        out_specs=pl.BlockSpec((8, _LANE), lambda c, j: (c, 0)),
        scratch_shapes=[pltpu.VMEM((tm, _LANE), jnp.float32)],
        compiler_params=pltpu.CompilerParams(
            dimension_semantics=("parallel", "arbitrary"),
            vmem_limit_bytes=_VMEM_LIMIT),
        cost_estimate=pl.CostEstimate(
            flops=flops, transcendentals=0,
            bytes_accessed=in_bytes + npart * 8 * _LANE * 4),
    )(*slabs)

    # Tiny (<= 8 KiB) partial block fold left to XLA glue.
    return jnp.sum(partials).astype(orig_dtype)


if __name__ == "__main__":
    key = jax.random.PRNGKey(0)
    k1, k2, k3 = jax.random.split(key, 3)
    shape = (2, 4, 16, 16)  # NCHW, like the PyTorch module's conv-style inputs
    pred = jax.random.normal(k1, shape, dtype=jnp.float32)
    target = jax.random.normal(k2, shape, dtype=jnp.float32)
    weight = jax.random.uniform(k3, shape, dtype=jnp.float32)

    # default module config: reduction='mean', loss_weight=1.0 (weighted)
    loss = l1_loss_pallas(pred, target, weight=weight,
                          reduction='mean', loss_weight=1.0)
    jax.block_until_ready(loss)
    ref = jnp.mean(jnp.abs(pred - target) * weight)
    assert jnp.allclose(loss, ref, rtol=1e-5, atol=1e-6), (loss, ref)

    # unweighted path (specialized 2-input kernel)
    loss_nw = l1_loss_pallas(pred, target, reduction='mean', loss_weight=1.0)
    jax.block_until_ready(loss_nw)
    ref_nw = jnp.mean(jnp.abs(pred - target))
    assert jnp.allclose(loss_nw, ref_nw, rtol=1e-5, atol=1e-6), (loss_nw, ref_nw)

    # 'sum' reduction with non-trivial loss_weight (fused in-kernel)
    loss_sum = l1_loss_pallas(pred, target, weight=weight, reduction='sum',
                              loss_weight=0.5)
    jax.block_until_ready(loss_sum)
    ref_sum = 0.5 * jnp.sum(jnp.abs(pred - target) * weight)
    assert jnp.allclose(loss_sum, ref_sum, rtol=1e-5, atol=1e-4), (loss_sum, ref_sum)

    # 'none' reduction (elementwise, loss_weight fused, aligned: no pad/slice)
    loss_none = l1_loss_pallas(pred, target, weight=weight, reduction='none',
                               loss_weight=2.0)
    jax.block_until_ready(loss_none)
    assert loss_none.shape == shape
    ref_none = 2.0 * jnp.abs(pred - target) * weight
    assert jnp.allclose(loss_none, ref_none, rtol=1e-5, atol=1e-6)

    # 128-aligned, rows not a multiple of 8 (single full-dims block, no pad)
    rg_shape = (10, 128)
    pr = jax.random.normal(k1, rg_shape, dtype=jnp.float32)
    tr = jax.random.normal(k2, rg_shape, dtype=jnp.float32)
    loss_rg = l1_loss_pallas(pr, tr, reduction='mean')
    jax.block_until_ready(loss_rg)
    assert jnp.allclose(loss_rg, jnp.mean(jnp.abs(pr - tr)), rtol=1e-5, atol=1e-6)

    # multi-block + ragged last block (in-kernel tail mask, no pad copy)
    big_shape = (2060, 128)
    pb = jax.random.normal(k1, big_shape, dtype=jnp.float32)
    tb = jax.random.normal(k2, big_shape, dtype=jnp.float32)
    loss_big = l1_loss_pallas(pb, tb, reduction='mean')
    jax.block_until_ready(loss_big)
    assert jnp.allclose(loss_big, jnp.mean(jnp.abs(pb - tb)), rtol=1e-4, atol=1e-6)

    # non-128-divisible total size (minimal pad path)
    odd_shape = (3, 5, 7)
    po = jax.random.normal(k1, odd_shape, dtype=jnp.float32)
    to = jax.random.normal(k2, odd_shape, dtype=jnp.float32)
    loss_odd = l1_loss_pallas(po, to, reduction='mean')
    jax.block_until_ready(loss_odd)
    assert jnp.allclose(loss_odd, jnp.mean(jnp.abs(po - to)),
                        rtol=1e-5, atol=1e-6)

    print("KERNEL_OK")
</pallas_src>

<mosaic_0001>
module attributes {stable_mosaic.version = 11 : i64} {
  func.func @kernel(%arg0: i32, %arg1: i32, %arg2: memref<16x128xf32, #tpu.memory_space<vmem>>, %arg3: memref<16x128xf32, #tpu.memory_space<vmem>>, %arg4: memref<16x128xf32, #tpu.memory_space<vmem>>, %arg5: memref<8x128xf32, #tpu.memory_space<vmem>>, %arg6: memref<16x128xf32, #tpu.memory_space<vmem>>) attributes {dimension_semantics = [#tpu.dimension_semantics<parallel>, #tpu.dimension_semantics<arbitrary>], iteration_bounds = array<i64: 1, 1>, scalar_prefetch = 0 : i64, scratch_operands = 1 : i64, tpu.core_type = #tpu.core_type<tc>, window_params = [{transform_indices = @transform_0, window_bounds = array<i64: 16, 128>}, {transform_indices = @transform_1, window_bounds = array<i64: 16, 128>}, {transform_indices = @transform_2, window_bounds = array<i64: 16, 128>}, {transform_indices = @transform_3, window_bounds = array<i64: 8, 128>}]} {
    %c0_i32 = arith.constant 0 : i32
    %0 = arith.cmpi eq, %arg1, %c0_i32 : i32
    %1 = arith.extui %0 : i1 to i32
    %c0_i32_0 = arith.constant 0 : i32
    %2 = arith.cmpi ne, %1, %c0_i32_0 : i32
    scf.if %2 {
      %cst = arith.constant 0.000000e+00 : f32
      %15 = vector.broadcast %cst : f32 to vector<16x128xf32>
      %c0_12 = arith.constant 0 : index
      %c0_13 = arith.constant 0 : index
      %16 = vector.load %arg6[%c0_12, %c0_13] : memref<16x128xf32, #tpu.memory_space<vmem>>, vector<16x128xf32>
      tpu.vector_store %arg6[%c0_12, %c0_13], %15 {strides = array<i32>} : memref<16x128xf32, #tpu.memory_space<vmem>>, vector<16x128xf32>,
    } else {
    }
    %c0 = arith.constant 0 : index
    %c0_1 = arith.constant 0 : index
    %3 = vector.load %arg2[%c0, %c0_1] : memref<16x128xf32, #tpu.memory_space<vmem>>, vector<16x128xf32>
    %c0_2 = arith.constant 0 : index
    %c0_3 = arith.constant 0 : index
    %4 = vector.load %arg3[%c0_2, %c0_3] : memref<16x128xf32, #tpu.memory_space<vmem>>, vector<16x128xf32>
    %5 = arith.subf %3, %4 : vector<16x128xf32>
    %6 = math.absf %5 : vector<16x128xf32>
    %c0_4 = arith.constant 0 : index
    %c0_5 = arith.constant 0 : index
    %7 = vector.load %arg4[%c0_4, %c0_5] : memref<16x128xf32, #tpu.memory_space<vmem>>, vector<16x128xf32>
    %8 = arith.mulf %6, %7 : vector<16x128xf32>
    %c0_6 = arith.constant 0 : index
    %c0_7 = arith.constant 0 : index
    %9 = vector.load %arg6[%c0_6, %c0_7] : memref<16x128xf32, #tpu.memory_space<vmem>>, vector<16x128xf32>
    %10 = arith.addf %9, %8 : vector<16x128xf32>
    %c0_8 = arith.constant 0 : index
    %c0_9 = arith.constant 0 : index
    %11 = vector.load %arg6[%c0_8, %c0_9] : memref<16x128xf32, #tpu.memory_space<vmem>>, vector<16x128xf32>
    tpu.vector_store %arg6[%c0_8, %c0_9], %10 {strides = array<i32>} : memref<16x128xf32, #tpu.memory_space<vmem>>, vector<16x128xf32>,
    %c0_i32_10 = arith.constant 0 : i32
    %12 = arith.cmpi eq, %arg1, %c0_i32_10 : i32
    %13 = arith.extui %12 : i1 to i32
    %c0_i32_11 = arith.constant 0 : i32
    %14 = arith.cmpi ne, %13, %c0_i32_11 : i32
    scf.if %14 {
      %c0_12 = arith.constant 0 : index
      %c0_13 = arith.constant 0 : index
      %15 = vector.load %arg6[%c0_12, %c0_13] : memref<16x128xf32, #tpu.memory_space<vmem>>, vector<16x128xf32>
      %cst = arith.constant 4.8828125E-4 : f32
      %16 = vector.broadcast %cst : f32 to vector<16x128xf32>
      %17 = arith.mulf %15, %16 : vector<16x128xf32>
      %18 = vector.shape_cast %17 : vector<16x128xf32> to vector<2x8x128xf32>
      %cst_14 = arith.constant dense<0.000000e+00> : vector<8x128xf32>
      %19 = vector.multi_reduction <add>, %18, %cst_14 [0] : vector<2x8x128xf32> to vector<8x128xf32>
      %c0_15 = arith.constant 0 : index
      %c0_16 = arith.constant 0 : index
      %20 = vector.load %arg5[%c0_15, %c0_16] : memref<8x128xf32, #tpu.memory_space<vmem>>, vector<8x128xf32>
      tpu.vector_store %arg5[%c0_15, %c0_16], %19 {strides = array<i32>} : memref<8x128xf32, #tpu.memory_space<vmem>>, vector<8x128xf32>,
    } else {
    }
    return
  }
  func.func @transform_0(%arg0: i32, %arg1: i32) -> (i32, i32) {
    %c1_i32 = arith.constant 1 : i32
    %0 = arith.muli %arg0, %c1_i32 : i32
    %1 = arith.addi %0, %arg1 : i32
    %c0_i32 = arith.constant 0 : i32
    %c0_i32_0 = arith.constant 0 : i32
    return %1, %c0_i32 : i32, i32
  }
  func.func @transform_1(%arg0: i32, %arg1: i32) -> (i32, i32) {
    %c1_i32 = arith.constant 1 : i32
    %0 = arith.muli %arg0, %c1_i32 : i32
    %1 = arith.addi %0, %arg1 : i32
    %c0_i32 = arith.constant 0 : i32
    %c0_i32_0 = arith.constant 0 : i32
    return %1, %c0_i32 : i32, i32
  }
  func.func @transform_2(%arg0: i32, %arg1: i32) -> (i32, i32) {
    %c1_i32 = arith.constant 1 : i32
    %0 = arith.muli %arg0, %c1_i32 : i32
    %1 = arith.addi %0, %arg1 : i32
    %c0_i32 = arith.constant 0 : i32
    %c0_i32_0 = arith.constant 0 : i32
    return %1, %c0_i32 : i32, i32
  }
  func.func @transform_3(%arg0: i32, %arg1: i32) -> (i32, i32) {
    %c0_i32 = arith.constant 0 : i32
    %c0_i32_0 = arith.constant 0 : i32
    return %arg0, %c0_i32 : i32, i32
  }
}

</mosaic_0001>

<llo_original>
// kernel: tpu_custom_call.1
$region0: #{tpu_custom_call.1}
  #allocation0 [shape = 'u32[]', space=smem, size = 0x4, offset = 0x4, fixed_abs, tag = 'smem constant byte address 0x4 - core index']
  #allocation1 [shape = 'u32[144,128]{1,0:T(1,128)}', space=vmem, size = 0x12000, scoped, tag = 'internal scratch']
  #allocation2 [shape = 'f32[16,128]{1,0:T(8,128)}', space=vmem, size = 0x2000, scoped, tag = 'scratch operand']
  %s0 = inlined_call_operand.hbm [shape: f32[16,128], index: 0, kind: input, shape index: {}]
  %s1 = inlined_call_operand.hbm [shape: f32[16,128], index: 1, kind: input, shape index: {}]
  %s2 = inlined_call_operand.hbm [shape: f32[16,128], index: 2, kind: input, shape index: {}]
  %s3 = inlined_call_operand.hbm [shape: f32[8,128], index: 3, kind: output, shape index: {}]
  %s4 = sld [smem:[#allocation0]]
  $region42: #{tpu_custom_call.1} parent=0
    _
  %s6 = ssub.s32 1, %s4
  %s7 = scalar_select 0, %s6, %s4
  $region1: #{tpu_custom_call.1} parent=0
    #allocation3 [shape = 'u8[8192]{0}', space=vmem, size = 0x2000, scoped, tag = 'input window, operand 0, single buffered']
    #allocation4 [shape = 's32[1]{0}', space=sflag, size = 0x4, scoped, tag = 'scoped memory for tpu_custom_call.1']
    #allocation5 [shape = 's32[1]{0}', space=sflag, size = 0x4, scoped, tag = 'scoped memory for tpu_custom_call.1']
    #allocation6 [shape = 'u8[8192]{0}', space=vmem, size = 0x2000, scoped, tag = 'input window, operand 1, single buffered']
    #allocation7 [shape = 's32[1]{0}', space=sflag, size = 0x4, scoped, tag = 'scoped memory for tpu_custom_call.1']
    #allocation8 [shape = 'u8[8192]{0}', space=vmem, size = 0x2000, scoped, tag = 'input window, operand 2, single buffered']
    #allocation9 [shape = 'u8[4096]{0}', space=vmem, size = 0x1000, scoped, tag = 'output window, operand 0, single buffered']
    %8 = vsyncpa [#allocation4], 0
    %9 = vsyncpa [#allocation7], 0
    %10 = vsyncpa [#allocation5], 0
    // Predicated region
    $region2: #{tpu_custom_call.1} parent=1 // pred_check
      _
    $region3: #{tpu_custom_call.1} parent=1 // pred_check_branch
      %12 = sbr.rel (0) target = $region5
    $region4: #{tpu_custom_call.1} parent=1 // pred_region
      %s13 = sadd.s32 0, 0
      %s14 = smul.u32 2, %s13
      %s16 = ssub.s32 256, 256
      %17 = vsyncadd [#allocation4], %s16
      %s18 = smul.addr %s14, 128
      %s19 = scalar_lea.hbm %s0, %s18
      %s20 = sshll.u32 [#allocation3], 4
      %s21 = int_to_ptr.vmem [resolvable:$true] %s20
      %26 = dma.hbm_to_vmem [thread:$0]  %s19, 256, %s21, [#allocation4], 128, 128, 8
    $region5: #{tpu_custom_call.1} parent=1 // pred_fallthru
      _
    // Predicated region
    $region6: #{tpu_custom_call.1} parent=1 // pred_check
      _
    $region7: #{tpu_custom_call.1} parent=1 // pred_check_branch
      %28 = sbr.rel (0) target = $region9
    $region8: #{tpu_custom_call.1} parent=1 // pred_region
      %s29 = sadd.s32 0, 0
      %s30 = smul.u32 2, %s29
      %s32 = ssub.s32 256, 256
      %33 = vsyncadd [#allocation7], %s32
      %s34 = smul.addr %s30, 128
      %s35 = scalar_lea.hbm %s1, %s34
      %s36 = sshll.u32 [#allocation6], 4
      %s37 = int_to_ptr.vmem [resolvable:$true] %s36
      %42 = dma.hbm_to_vmem [thread:$0]  %s35, 256, %s37, [#allocation7], 128, 128, 8
    $region9: #{tpu_custom_call.1} parent=1 // pred_fallthru
      _
    // Predicated region
    $region10: #{tpu_custom_call.1} parent=1 // pred_check
      _
    $region11: #{tpu_custom_call.1} parent=1 // pred_check_branch
      %44 = sbr.rel (0) target = $region13
    $region12: #{tpu_custom_call.1} parent=1 // pred_region
      %s45 = sadd.s32 0, 0
      %s46 = smul.u32 2, %s45
      %s48 = ssub.s32 256, 256
      %49 = vsyncadd [#allocation7], %s48
      %s50 = smul.addr %s46, 128
      %s51 = scalar_lea.hbm %s2, %s50
      %s52 = sshll.u32 [#allocation8], 4
      %s53 = int_to_ptr.vmem [resolvable:$true] %s52
      %58 = dma.hbm_to_vmem [thread:$0]  %s51, 256, %s53, [#allocation7], 128, 128, 8
    $region13: #{tpu_custom_call.1} parent=1 // pred_fallthru
      _
    // Predicated region
    $region14: #{tpu_custom_call.1} parent=1 // pred_check
      _
    $region15: #{tpu_custom_call.1} parent=1 // pred_check_branch
      %60 = sbr.rel (0) target = $region17
    $region16: #{tpu_custom_call.1} parent=1 // pred_region
      %61 = dma.done [#allocation4], 256
    $region17: #{tpu_custom_call.1} parent=1 // pred_fallthru
      _
    // Predicated region
    $region18: #{tpu_custom_call.1} parent=1 // pred_check
      _
    $region19: #{tpu_custom_call.1} parent=1 // pred_check_branch
      %63 = sbr.rel (0) target = $region21
    $region20: #{tpu_custom_call.1} parent=1 // pred_region
      %64 = dma.done [#allocation7], 256
    $region21: #{tpu_custom_call.1} parent=1 // pred_fallthru
      _
    // Predicated region
    $region22: #{tpu_custom_call.1} parent=1 // pred_check
      _
    $region23: #{tpu_custom_call.1} parent=1 // pred_check_branch
      %66 = sbr.rel (0) target = $region25
    $region24: #{tpu_custom_call.1} parent=1 // pred_region
      %67 = dma.done [#allocation7], 256
    $region25: #{tpu_custom_call.1} parent=1 // pred_fallthru
      _
    %s68 = sadd.s32 0, 0
    %s69 = smul.u32 2, %s68
    %s70 = sadd.s32 0, 0
    %s71 = smul.u32 2, %s70
    %s72 = sadd.s32 0, 0
    %s73 = smul.u32 2, %s72
    %p74 = scmp.eq.s32.totalorder 0, 0
    // Predicated region
    $region26: #{tpu_custom_call.1} parent=1 // pred_check
      %p75 = pneg %p74
    $region27: #{tpu_custom_call.1} parent=1 // pred_check_branch
      %77 = sbr.rel (%p75) target = $region29
    $region28: #{tpu_custom_call.1} parent=1 // pred_region
      %78 = vst [vmem:[#allocation2] sm:$0xff] 0.0
      %79 = vst [vmem:[#allocation2 + $0x8] sm:$0xff] 0.0
    $region29: #{tpu_custom_call.1} parent=1 // pred_fallthru
      _
    %v80 = vld [vmem:[#allocation3] sm:$0xff]
    %v81 = vld [vmem:[#allocation3 + $0x8] sm:$0xff]
    %v82 = vld [vmem:[#allocation6] sm:$0xff]
    %v83 = vld [vmem:[#allocation6 + $0x8] sm:$0xff]
    %v84 = vsub.f32 %v80, %v82
    %v85 = vsub.f32 %v81, %v83
    %v86 = vand.u32 2147483647, %v84
    %v87 = vand.u32 2147483647, %v85
    %v88 = vld [vmem:[#allocation8] sm:$0xff]
    %v89 = vld [vmem:[#allocation8 + $0x8] sm:$0xff]
    %v90 = vmul.f32 %v86, %v88
    %v91 = vmul.f32 %v87, %v89
    %v92 = vld [vmem:[#allocation2] sm:$0xff]
    %v93 = vld [vmem:[#allocation2 + $0x8] sm:$0xff]
    %v94 = vadd.f32 %v92, %v90
    %v95 = vadd.f32 %v93, %v91
    %96 = vst [vmem:[#allocation2] sm:$0xff] %v94
    %97 = vst [vmem:[#allocation2 + $0x8] sm:$0xff] %v95
    // Predicated region
    $region30: #{tpu_custom_call.1} parent=1 // pred_check
      %p98 = pneg %p74
    $region31: #{tpu_custom_call.1} parent=1 // pred_check_branch
      %100 = sbr.rel (%p98) target = $region33
    $region32: #{tpu_custom_call.1} parent=1 // pred_region
      %v101 = vld [vmem:[#allocation2] sm:$0xff]
      %v102 = vld [vmem:[#allocation2 + $0x8] sm:$0xff]
      %v103 = vmul.f32 %v101, 0.00048828125
      %v104 = vmul.f32 %v102, 0.00048828125
      %v105 = vadd.f32 %v103, %v104
      %106 = vst [vmem:[#allocation9] sm:$0xff] %v105
    $region33: #{tpu_custom_call.1} parent=1 // pred_fallthru
      _
    // Predicated region
    $region34: #{tpu_custom_call.1} parent=1 // pred_check
      _
    $region35: #{tpu_custom_call.1} parent=1 // pred_check_branch
      %108 = sbr.rel (0) target = $region37
    $region36: #{tpu_custom_call.1} parent=1 // pred_region
      %s110 = ssub.s32 128, 128
      %111 = vsyncadd [#allocation5], %s110
      %s113 = sshll.u32 [#allocation9], 4
      %s114 = int_to_ptr.vmem [resolvable:$true] %s113
      %116 = dma.vmem_to_hbm [thread:$0]  %s114, 128, %s3, [#allocation5]
    $region37: #{tpu_custom_call.1} parent=1 // pred_fallthru
      _
    // Predicated region
    $region38: #{tpu_custom_call.1} parent=1 // pred_check
      _
    $region39: #{tpu_custom_call.1} parent=1 // pred_check_branch
      %118 = sbr.rel (0) target = $region41
    $region40: #{tpu_custom_call.1} parent=1 // pred_region
      %119 = dma.done [#allocation5], 128
    $region41: #{tpu_custom_call.1} parent=1 // pred_fallthru
      _
    %120 = vsyncpa [#allocation4], 1
    %121 = vsyncpa [#allocation7], 1
    %122 = vsyncpa [#allocation5], 1

</llo_original>
